<compile_context>
chip_gen: v5e
topology: v5e:2x2
jax: 0.10.0
libtpu: 0.0.40
codegen_flags: <defaults>
</compile_context>

<pallas_src>
import functools

import jax
import jax.numpy as jnp
from jax.experimental import pallas as pl
from jax.experimental.pallas import tpu as pltpu


def _conv1x1_kernel(x_ref, w_ref, b_ref, o_ref):
    # x_ref: (1, Cin, TP), w_ref: (Cout, Cin), b_ref: (Cout, 1), o_ref: (1, Cout, TP)
    x = x_ref[0]                                   # (Cin, TP), pixels lane-dense
    acc = jnp.dot(w_ref[...], x, preferred_element_type=jnp.float32)  # (Cout, TP)
    acc = acc + b_ref[...].astype(jnp.float32)     # lane-broadcast of (Cout, 1)
    o_ref[0] = acc.astype(o_ref.dtype)


@functools.partial(jax.jit, static_argnames=("max_pixels_per_tile",))
def polar_backbone_pre(x_nchw, weight, bias, *, max_pixels_per_tile=2048):
    """Forward pass of PolarBackbonePre: nn.Conv2d(Cin, Cout, (1,1), padding='same').

    x_nchw : (N, Cin, H, W)     float32
    weight : (Cout, Cin, 1, 1)  float32  (PyTorch conv weight layout)
    bias   : (Cout,)            float32
    returns: (N, Cout, H, W)    float32
    """
    assert max_pixels_per_tile % 128 == 0, "pixel tile must be lane-aligned (x128)"

    n, cin, h, w = x_nchw.shape
    cout = weight.shape[0]
    hw = h * w

    # Free reshapes: stay in NCHW, no transposes.
    x3 = x_nchw.reshape(n, cin, hw)         # (N, Cin, HW)
    w_mat = weight.reshape(cout, cin)       # (Cout, Cin)
    b_col = bias.reshape(cout, 1)           # (Cout, 1)

    # Pixel-axis tiling: one full-HW tile when it fits (valid for any HW, since
    # a block equal to the full dim needs no 128-alignment), else 128-aligned
    # tiles with zero-padding on the pixel axis.
    if hw <= max_pixels_per_tile:
        tp = hw
        hw_pad = hw
    else:
        tp = max_pixels_per_tile
        hw_pad = pl.cdiv(hw, tp) * tp
        if hw_pad != hw:
            x3 = jnp.pad(x3, ((0, 0), (0, 0), (0, hw_pad - hw)))
    num_pixel_tiles = hw_pad // tp

    y3 = pl.pallas_call(
        _conv1x1_kernel,
        out_shape=jax.ShapeDtypeStruct((n, cout, hw_pad), x_nchw.dtype),
        grid_spec=pl.GridSpec(
            grid=(n, num_pixel_tiles),
            in_specs=[
                pl.BlockSpec((1, cin, tp), lambda i, p: (i, 0, p)),   # pixel tile
                pl.BlockSpec((cout, cin), lambda i, p: (0, 0)),       # weight, resident
                pl.BlockSpec((cout, 1), lambda i, p: (0, 0)),         # bias, resident
            ],
            out_specs=pl.BlockSpec((1, cout, tp), lambda i, p: (i, 0, p)),
        ),
        compiler_params=pltpu.CompilerParams(
            dimension_semantics=("parallel", "parallel"),  # shard over both TCs on v7x
        ),
    )(x3, w_mat, b_col)

    if hw_pad != hw:
        y3 = y3[:, :, :hw]
    return y3.reshape(n, cout, h, w)


if __name__ == "__main__":
    # Small shapes consistent with the module: batch=2, in_channels=4,
    # spatial 16x16, out_channels=96 (module default).
    N, CIN, H, W = 2, 4, 16, 16
    COUT = 96

    key = jax.random.PRNGKey(0)
    kx, kw, kb = jax.random.split(key, 3)

    x = jax.random.normal(kx, (N, CIN, H, W), dtype=jnp.float32)

    # Deterministic parameter init (mimicking PyTorch's uniform fan-in bound).
    fan_in = CIN * 1 * 1
    bound = 1.0 / (fan_in ** 0.5)
    weight = jax.random.uniform(kw, (COUT, CIN, 1, 1), jnp.float32, -bound, bound)
    bias = jax.random.uniform(kb, (COUT,), jnp.float32, -bound, bound)

    y = polar_backbone_pre(x, weight, bias)
    jax.block_until_ready(y)

    # Reference check in plain JAX (same math as the PyTorch 1x1 conv).
    y_ref = jnp.einsum("nchw,oc->nohw", x, weight.reshape(COUT, CIN)) + bias[None, :, None, None]
    assert y.shape == (N, COUT, H, W)
    assert jnp.allclose(y, y_ref, atol=1e-5, rtol=1e-5)

    print("KERNEL_OK")
</pallas_src>

<mosaic_0001>
module attributes {stable_mosaic.version = 11 : i64} {
  func.func @_conv1x1_kernel(%arg0: i32, %arg1: i32, %arg2: memref<1x4x256xf32, #tpu.memory_space<vmem>>, %arg3: memref<96x4xf32, #tpu.memory_space<vmem>>, %arg4: memref<96x1xf32, #tpu.memory_space<vmem>>, %arg5: memref<1x96x256xf32, #tpu.memory_space<vmem>>) attributes {dimension_semantics = [#tpu.dimension_semantics<parallel>, #tpu.dimension_semantics<parallel>], iteration_bounds = array<i64: 2, 1>, scalar_prefetch = 0 : i64, scratch_operands = 0 : i64, tpu.core_type = #tpu.core_type<tc>, window_params = [{transform_indices = @transform_0, window_bounds = array<i64: 1, 4, 256>}, {pipeline_mode = #tpu.pipeline_mode<synchronous>, transform_indices = @transform_1, window_bounds = array<i64: 96, 4>}, {pipeline_mode = #tpu.pipeline_mode<synchronous>, transform_indices = @transform_2, window_bounds = array<i64: 96, 1>}, {transform_indices = @transform_3, window_bounds = array<i64: 1, 96, 256>}]} {
    %c0 = arith.constant 0 : index
    %c0_0 = arith.constant 0 : index
    %c0_1 = arith.constant 0 : index
    %0 = vector.load %arg2[%c0, %c0_0, %c0_1] : memref<1x4x256xf32, #tpu.memory_space<vmem>>, vector<1x4x256xf32>
    %1 = vector.shape_cast %0 : vector<1x4x256xf32> to vector<4x256xf32>
    %c0_2 = arith.constant 0 : index
    %c0_3 = arith.constant 0 : index
    %2 = vector.load %arg3[%c0_2, %c0_3] : memref<96x4xf32, #tpu.memory_space<vmem>>, vector<96x4xf32>
    %cst = arith.constant dense<0.000000e+00> : vector<96x256xf32>
    %3 = tpu.matmul %2, %1, %cst {dimension_numbers = #tpu.dot_dimension_numbers<[1], [0], [0], [1], [0, 0, 1, 1], [], []>} : vector<96x4xf32>, vector<4x256xf32>, vector<96x256xf32> -> vector<96x256xf32>
    %c0_4 = arith.constant 0 : index
    %c0_5 = arith.constant 0 : index
    %4 = vector.load %arg4[%c0_4, %c0_5] : memref<96x1xf32, #tpu.memory_space<vmem>>, vector<96x1xf32>
    %5 = vector.broadcast %4 : vector<96x1xf32> to vector<96x256xf32>
    %6 = arith.addf %3, %5 : vector<96x256xf32>
    %c0_6 = arith.constant 0 : index
    %c0_7 = arith.constant 0 : index
    %c0_8 = arith.constant 0 : index
    %7 = vector.load %arg5[%c0_6, %c0_7, %c0_8] : memref<1x96x256xf32, #tpu.memory_space<vmem>>, vector<1x96x256xf32>
    %8 = vector.shape_cast %7 : vector<1x96x256xf32> to vector<96x256xf32>
    %9 = vector.shape_cast %6 : vector<96x256xf32> to vector<1x96x256xf32>
    tpu.vector_store %arg5[%c0_6, %c0_7, %c0_8], %9 {strides = array<i32>} : memref<1x96x256xf32, #tpu.memory_space<vmem>>, vector<1x96x256xf32>,
    return
  }
  func.func @transform_0(%arg0: i32, %arg1: i32) -> (i32, i32, i32) {
    %c0_i32 = arith.constant 0 : i32
    %c0_i32_0 = arith.constant 0 : i32
    return %arg0, %c0_i32, %arg1 : i32, i32, i32
  }
  func.func @transform_1(%arg0: i32, %arg1: i32) -> (i32, i32) {
    %c0_i32 = arith.constant 0 : i32
    %c0_i32_0 = arith.constant 0 : i32
    %c0_i32_1 = arith.constant 0 : i32
    return %c0_i32, %c0_i32_0 : i32, i32
  }
  func.func @transform_2(%arg0: i32, %arg1: i32) -> (i32, i32) {
    %c0_i32 = arith.constant 0 : i32
    %c0_i32_0 = arith.constant 0 : i32
    %c0_i32_1 = arith.constant 0 : i32
    return %c0_i32, %c0_i32_0 : i32, i32
  }
  func.func @transform_3(%arg0: i32, %arg1: i32) -> (i32, i32, i32) {
    %c0_i32 = arith.constant 0 : i32
    %c0_i32_0 = arith.constant 0 : i32
    return %arg0, %c0_i32, %arg1 : i32, i32, i32
  }
}

</mosaic_0001>

<llo_original>
// kernel: polar_backbone_pre.1
$region0: #{polar_backbone_pre.1}
  #allocation0 [shape = 'u32[]', space=smem, size = 0x4, offset = 0x4, fixed_abs, tag = 'smem constant byte address 0x4 - core index']
  #allocation1 [shape = 'u32[72,128]{1,0:T(1,128)}', space=vmem, size = 0x9000, scoped, tag = 'internal scratch']
  %s0 = inlined_call_operand.vmem [shape: f32[2,4,256], index: 0, kind: input, shape index: {}]
  %s1 = inlined_call_operand.vmem [shape: f32[96,4], index: 1, kind: input, shape index: {}]
  %s2 = inlined_call_operand.vmem [shape: f32[96,1], index: 2, kind: input, shape index: {}]
  %s3 = inlined_call_operand.vmem [shape: f32[2,96,256], index: 3, kind: output, shape index: {}]
  %s4 = sld [smem:[#allocation0]]
  $region45: #{polar_backbone_pre.1} parent=0
    _
  %s6 = ssub.s32 1, %s4
  %s7 = scalar_select 0, %s6, %s4
  loop: start=0, step=1, limit=4
  $region2: #{polar_backbone_pre.1} parent=0 // loop_pre_header
    _
  $region3: #{polar_backbone_pre.1} parent=0 // loop_header
    %s9 = sphi 0, %s13
    %p10 = scmp.ge.s32.totalorder %s9, 4
    %s16 = sphi 0, %s28
    %s17 = sphi 0, %s24
    %s18 = sphi 0, %s16
    %s19 = sphi 0, %s17
    %s20 = sphi 0, %s18
    %s21 = sphi 0, %s19
    %s33 = sphi 0, %s35
    %s36 = sphi 0, %s33
    %s37 = sphi 0, %s36
    %s53 = sphi 0, %s37
    %s57 = sphi 0, %s57
    %s59 = sphi 0, %s57
    %s60 = sphi 0, %s59
    %s74 = sphi 0, %s60
    %s78 = sphi 0, %s78
    %s80 = sphi 0, %s78
    %s81 = sphi 0, %s80
    %s95 = sphi 0, %s81
    %s103 = sphi 0, %s105
    %s106 = sphi 0, %s103
    %s107 = sphi 0, %s106
    %s123 = sphi 0, %s107
  $region4: #{polar_backbone_pre.1} parent=0 // loop_header_branch
    %12 = sbr.rel (%p10) target = $region8
  $region5: #{polar_backbone_pre.1} parent=0 // loop_body
    %s14 = ssub.s32 %s9, 1
    %s15 = ssub.s32 %s9, 2
    %s22 = sadd.s32 1, %s17
    %p23 = scmp.ge.s32.totalorder %s22, 1
    %s24 = scalar_select %p23, 0, %s22
    %s25 = sadd.s32 1, %s16
    %s26 = scalar_select %p23, %s25, %s16
    %p27 = scmp.ge.s32.totalorder %s26, 2
    %s28 = scalar_select %p27, 0, %s26
    %s29 = ssub.s32 %s16, %s28
    %s30 = ssub.s32 %s17, %s24
    %s31 = sor.u32 %s29, %s30
    %p32 = scmp.eq.s32.totalorder %s31, 0
    %s34 = sadd.s32 %s33, 1
    %s35 = scalar_select %p32, %s33, %s34
    %p38 = pneg %p32
    %p39 = scmp.eq.s32.totalorder %s9, 1
    %p40 = por %p38, %p39
    %p41 = scmp.ne.s32.totalorder %s33, %s36
    %p42 = scmp.eq.s32.totalorder %s9, 0
    %p43 = por %p41, %p42
    %p44 = scmp.ne.s32.totalorder %s33, %s36
    %p45 = scmp.eq.s32.totalorder %s14, 1
    %p46 = por %p44, %p45
    %p47 = scmp.ne.s32.totalorder %s36, %s37
    %p48 = scmp.eq.s32.totalorder %s14, 0
    %p49 = por %p47, %p48
    %p50 = scmp.ne.s32.totalorder %s36, %s37
    %p51 = scmp.eq.s32.totalorder %s15, 1
    %p52 = por %p50, %p51
    %p54 = scmp.ne.s32.totalorder %s37, %s53
    %p55 = scmp.eq.s32.totalorder %s15, 0
    %p56 = por %p54, %p55
    %s58 = sadd.s32 %s57, 1
    %p61 = scmp.eq.s32.totalorder %s9, 1
    %p62 = scmp.ne.s32.totalorder %s57, %s59
    %p63 = scmp.eq.s32.totalorder %s9, 0
    %p64 = por %p62, %p63
    %p65 = scmp.ne.s32.totalorder %s57, %s59
    %p66 = scmp.eq.s32.totalorder %s14, 1
    %p67 = por %p65, %p66
    %p68 = scmp.ne.s32.totalorder %s59, %s60
    %p69 = scmp.eq.s32.totalorder %s14, 0
    %p70 = por %p68, %p69
    %p71 = scmp.ne.s32.totalorder %s59, %s60
    %p72 = scmp.eq.s32.totalorder %s15, 1
    %p73 = por %p71, %p72
    %p75 = scmp.ne.s32.totalorder %s60, %s74
    %p76 = scmp.eq.s32.totalorder %s15, 0
    %p77 = por %p75, %p76
    %s79 = sadd.s32 %s78, 1
    %p82 = scmp.eq.s32.totalorder %s9, 1
    %p83 = scmp.ne.s32.totalorder %s78, %s80
    %p84 = scmp.eq.s32.totalorder %s9, 0
    %p85 = por %p83, %p84
    %p86 = scmp.ne.s32.totalorder %s78, %s80
    %p87 = scmp.eq.s32.totalorder %s14, 1
    %p88 = por %p86, %p87
    %p89 = scmp.ne.s32.totalorder %s80, %s81
    %p90 = scmp.eq.s32.totalorder %s14, 0
    %p91 = por %p89, %p90
    %p92 = scmp.ne.s32.totalorder %s80, %s81
    %p93 = scmp.eq.s32.totalorder %s15, 1
    %p94 = por %p92, %p93
    %p96 = scmp.ne.s32.totalorder %s81, %s95
    %p97 = scmp.eq.s32.totalorder %s15, 0
    %p98 = por %p96, %p97
    %s99 = ssub.s32 %s16, %s28
    %s100 = ssub.s32 %s17, %s24
    %s101 = sor.u32 %s99, %s100
    %p102 = scmp.eq.s32.totalorder %s101, 0
    %s104 = sadd.s32 %s103, 1
    %s105 = scalar_select %p102, %s103, %s104
    %p108 = pneg %p102
    %p109 = scmp.eq.s32.totalorder %s9, 1
    %p110 = por %p108, %p109
    %p111 = scmp.ne.s32.totalorder %s103, %s106
    %p112 = scmp.eq.s32.totalorder %s9, 0
    %p113 = por %p111, %p112
    %p114 = scmp.ne.s32.totalorder %s103, %s106
    %p115 = scmp.eq.s32.totalorder %s14, 1
    %p116 = por %p114, %p115
    %p117 = scmp.ne.s32.totalorder %s106, %s107
    %p118 = scmp.eq.s32.totalorder %s14, 0
    %p119 = por %p117, %p118
    %p120 = scmp.ne.s32.totalorder %s106, %s107
    %p121 = scmp.eq.s32.totalorder %s15, 1
    %p122 = por %p120, %p121
    %p124 = scmp.ne.s32.totalorder %s107, %s123
    %p125 = scmp.eq.s32.totalorder %s15, 0
    %p126 = por %p124, %p125
    %p127 = scmp.le.s32.totalorder 1, %s9
    %p128 = scmp.lt.s32.totalorder %s9, 3
    %p129 = pnand %p127, %p128
    %p130 = pneg %p129
    // Predicated region
    $region9: #{polar_backbone_pre.1} parent=5 // pred_check
      _
    $region10: #{polar_backbone_pre.1} parent=5 // pred_check_branch
      %132 = sbr.rel (%p129) target = $region12
    $region11: #{polar_backbone_pre.1} parent=5 // pred_region
      %s133 = ssub.s32 %s9, 1
      // Predicated region
      $region13: #{polar_backbone_pre.1} parent=11 // pred_check
        %p134 = pneg %p70
      $region14: #{polar_backbone_pre.1} parent=11 // pred_check_branch
        %136 = sbr.rel (%p134) target = $region16
      $region15: #{polar_backbone_pre.1} parent=11 // pred_region
        _
      $region16: #{polar_backbone_pre.1} parent=11 // pred_fallthru
        _
      // Predicated region
      $region17: #{polar_backbone_pre.1} parent=11 // pred_check
        %p137 = pneg %p91
      $region18: #{polar_backbone_pre.1} parent=11 // pred_check_branch
        %139 = sbr.rel (%p137) target = $region20
      $region19: #{polar_backbone_pre.1} parent=11 // pred_region
        _
      $region20: #{polar_backbone_pre.1} parent=11 // pred_fallthru
        _
    $region12: #{polar_backbone_pre.1} parent=5 // pred_fallthru
      _
    %p140 = scmp.lt.s32.totalorder %s9, 2
    // Predicated region
    $region21: #{polar_backbone_pre.1} parent=5 // pred_check
      %p141 = pneg %p140
    $region22: #{polar_backbone_pre.1} parent=5 // pred_check_branch
      %143 = sbr.rel (%p141) target = $region24
    $region23: #{polar_backbone_pre.1} parent=5 // pred_region
      // Predicated region
      $region25: #{polar_backbone_pre.1} parent=23 // pred_check
        %p144 = pneg %p43
      $region26: #{polar_backbone_pre.1} parent=23 // pred_check_branch
        %146 = sbr.rel (%p144) target = $region28
      $region27: #{polar_backbone_pre.1} parent=23 // pred_region
        %s147 = smul.u32 2, %s17
        %p148 = scmp.lt.s32.totalorder %s16, 1
        %s149 = scalar_select %p148, %s16, 1
        %p150 = scmp.lt.s32.totalorder %s147, 1
        %s151 = scalar_select %p150, %s147, 1
        %s152 = smul.addr %s149, 2
        %s153 = sadd.s32 %s151, %s152
        %s154 = smul.addr %s153, 4
        %s155 = scalar_lea.vmem %s0, %s154
        %s156 = smul.u32 2, %s17
      $region28: #{polar_backbone_pre.1} parent=23 // pred_fallthru
        _
    $region24: #{polar_backbone_pre.1} parent=5 // pred_fallthru
      _
    %p157 = scmp.le.s32.totalorder 1, %s9
    %p158 = scmp.lt.s32.totalorder %s9, 3
    %p159 = pnand %p157, %p158
    %p160 = pneg %p159
    // Predicated region
    $region29: #{polar_backbone_pre.1} parent=5 // pred_check
      _
    $region30: #{polar_backbone_pre.1} parent=5 // pred_check_branch
      %162 = sbr.rel (%p159) target = $region32
    $region31: #{polar_backbone_pre.1} parent=5 // pred_region
      %s163 = ssub.s32 %s9, 1
      %s164 = smul.u32 2, %s19
      %p165 = scmp.lt.s32.totalorder %s18, 1
      %s166 = scalar_select %p165, %s18, 1
      %p167 = scmp.lt.s32.totalorder %s164, 1
      %s168 = scalar_select %p167, %s164, 1
      %s169 = smul.addr %s166, 2
      %s170 = sadd.s32 %s168, %s169
      %s171 = smul.addr %s170, 4
      %s172 = scalar_lea.vmem %s0, %s171
      %p173 = pneg %p49
      %p174 = pneg %p46
      %p175 = pneg %p70
      %p176 = pneg %p67
      %p177 = pneg %p91
      %p178 = pneg %p88
      %p179 = pneg %p119
      %p180 = pneg %p116
      %s181 = smul.u32 2, %s19
      %p182 = scmp.lt.s32.totalorder %s18, 1
      %s183 = scalar_select %p182, %s18, 1
      %p184 = scmp.lt.s32.totalorder %s181, 1
      %s185 = scalar_select %p184, %s181, 1
      %s186 = smul.addr %s183, 24
      %s187 = sadd.s32 %s185, %s186
      %s188 = smul.addr %s187, 8
      %s189 = scalar_lea.vmem %s3, %s188
      %s190 = smul.u32 2, %s19
      %p191 = scmp.lt.s32.totalorder %s18, 1
      %s192 = scalar_select %p191, %s18, 1
      %p193 = scmp.lt.s32.totalorder %s190, 1
      %s194 = scalar_select %p193, %s190, 1
      %s195 = smul.addr %s192, 2
      %s196 = sadd.s32 %s194, %s195
      %s197 = smul.addr %s196, 4
      %s198 = scalar_lea.vmem %s0, %s197
      %s199 = smul.u32 2, %s19
      %s200 = smul.u32 2, %s19
      %p201 = scmp.lt.s32.totalorder %s18, 1
      %s202 = scalar_select %p201, %s18, 1
      %p203 = scmp.lt.s32.totalorder %s200, 1
      %s204 = scalar_select %p203, %s200, 1
      %s205 = smul.addr %s202, 24
      %s206 = sadd.s32 %s204, %s205
      %s207 = smul.addr %s206, 8
      %s208 = scalar_lea.vmem %s3, %s207
      %s209 = smul.u32 2, %s19
      %v210 = vld [vmem:[%s198] sm:$0xff]
      %v211 = vld [vmem:[%s1] sm:$0xff]
      %v212 = vld [vmem:[%s1 + $0x8] sm:$0xff]
      %v213 = vld [vmem:[%s1 + $0x10] sm:$0xff]
      %v214 = vld [vmem:[%s1 + $0x18] sm:$0xff]
      %v215 = vld [vmem:[%s1 + $0x20] sm:$0xff]
      %v216 = vld [vmem:[%s1 + $0x28] sm:$0xff]
      %v217 = vld [vmem:[%s1 + $0x30] sm:$0xff]
      %v218 = vld [vmem:[%s1 + $0x38] sm:$0xff]
      %v219 = vld [vmem:[%s1 + $0x40] sm:$0xff]
      %v220 = vld [vmem:[%s1 + $0x48] sm:$0xff]
      %v221 = vld [vmem:[%s1 + $0x50] sm:$0xff]
      %v222 = vld [vmem:[%s1 + $0x58] sm:$0xff]
      %v223 = vld [vmem:[%s2] sm:$0xff]
      %v224 = vld [vmem:[%s2 + $0x8] sm:$0xff]
      %v225 = vld [vmem:[%s2 + $0x10] sm:$0xff]
      %v226 = vld [vmem:[%s2 + $0x18] sm:$0xff]
      %v227 = vld [vmem:[%s2 + $0x20] sm:$0xff]
      %v228 = vld [vmem:[%s2 + $0x28] sm:$0xff]
      %v229 = vld [vmem:[%s2 + $0x30] sm:$0xff]
      %v230 = vld [vmem:[%s2 + $0x38] sm:$0xff]
      %v231 = vld [vmem:[%s2 + $0x40] sm:$0xff]
      %v232 = vld [vmem:[%s2 + $0x48] sm:$0xff]
      %v233 = vld [vmem:[%s2 + $0x50] sm:$0xff]
      %v234 = vld [vmem:[%s2 + $0x58] sm:$0xff]
      %236 = vset.pattern.permute.xlu0 0
      %237 = vperm.xlu0 %236, %v223
      %v238 = vpop.permute.xlu0 %237
      %241 = vset.pattern.permute.xlu0 0
      %242 = vperm.xlu0 %241, %v224
      %v243 = vpop.permute.xlu0 %242
      %246 = vset.pattern.permute.xlu0 0
      %247 = vperm.xlu0 %246, %v225
      %v248 = vpop.permute.xlu0 %247
      %251 = vset.pattern.permute.xlu0 0
      %252 = vperm.xlu0 %251, %v226
      %v253 = vpop.permute.xlu0 %252
      %256 = vset.pattern.permute.xlu0 0
      %257 = vperm.xlu0 %256, %v227
      %v258 = vpop.permute.xlu0 %257
      %261 = vset.pattern.permute.xlu0 0
      %262 = vperm.xlu0 %261, %v228
      %v263 = vpop.permute.xlu0 %262
      %266 = vset.pattern.permute.xlu0 0
      %267 = vperm.xlu0 %266, %v229
      %v268 = vpop.permute.xlu0 %267
      %271 = vset.pattern.permute.xlu0 0
      %272 = vperm.xlu0 %271, %v230
      %v273 = vpop.permute.xlu0 %272
      %276 = vset.pattern.permute.xlu0 0
      %277 = vperm.xlu0 %276, %v231
      %v278 = vpop.permute.xlu0 %277
      %281 = vset.pattern.permute.xlu0 0
      %282 = vperm.xlu0 %281, %v232
      %v283 = vpop.permute.xlu0 %282
      %286 = vset.pattern.permute.xlu0 0
      %287 = vperm.xlu0 %286, %v233
      %v288 = vpop.permute.xlu0 %287
      %291 = vset.pattern.permute.xlu0 0
      %292 = vperm.xlu0 %291, %v234
      %v293 = vpop.permute.xlu0 %292
      %296 = vst [vmem:[#allocation1] ss:$2 sm:$0xff] %v210
      %v297 = vld.sshfl [vmem:[#allocation1] sm:$0xff pattern:$0x75316420]
      %v298 = vld.sshfl [vmem:[#allocation1 + $0x8] sm:$0xff pattern:$0x75316420]
      %vm299 = vcmask 31744
      %v301 = vsel %vm299, %v211, 0
      %v304 = vsel %vm299, %v212, 0
      %v307 = vsel %vm299, %v213, 0
      %v310 = vsel %vm299, %v214, 0
      %v313 = vsel %vm299, %v215, 0
      %v316 = vsel %vm299, %v216, 0
      %v319 = vsel %vm299, %v217, 0
      %v322 = vsel %vm299, %v218, 0
      %v325 = vsel %vm299, %v219, 0
      %v328 = vsel %vm299, %v220, 0
      %v331 = vsel %vm299, %v221, 0
      %v334 = vsel %vm299, %v222, 0
      %vm336 = vcmask 1043456
      %v337 = vsel %vm336, %v297, 0
      %v339 = vsel %vm336, %v298, 0
      %341 = vmatpush.msra.mxu0 0.0
      %342 = vmatpush.msra.mxu0 0.0
      %343 = vmatpush.msra.mxu0 0.0
      %344 = vmatpush.msra.mxu0 0.0
      %345 = vmatpush.msra.mxu0 0.0
      %346 = vmatpush.msra.mxu0 0.0
      %347 = vmatpush.msra.mxu0 0.0
      %348 = vmatpush.msra.mxu0 0.0
      %349 = vmatpush.msra.mxu0 0.0
      %350 = vmatpush.msra.mxu0 0.0
      %351 = vmatpush.msra.mxu0 0.0
      %352 = vmatpush.msra.mxu0 0.0
      %353 = vmatpush.msra.mxu0 0.0
      %354 = vmatpush.msra.mxu0 0.0
      %355 = vmatpush.msra.mxu0 0.0
      %356 = vmatpush.msra.mxu0 %v337
      %357 = vmatmul.f32.gmra.mxu0 %v301
      %v358 = vpop.f32.mrf.mxu0
      %v359 = vadd.f32 %v238, %v358
      %360 = vmatmul.f32.gmra.mxu0 %v304
      %v361 = vpop.f32.mrf.mxu0
      %v362 = vadd.f32 %v243, %v361
      %363 = vmatmul.f32.gmra.mxu0 %v307
      %v364 = vpop.f32.mrf.mxu0
      %v365 = vadd.f32 %v248, %v364
      %366 = vmatmul.f32.gmra.mxu0 %v310
      %v367 = vpop.f32.mrf.mxu0
      %v368 = vadd.f32 %v253, %v367
      %369 = vmatmul.f32.gmra.mxu0 %v313
      %v370 = vpop.f32.mrf.mxu0
      %v371 = vadd.f32 %v258, %v370
      %372 = vmatmul.f32.gmra.mxu0 %v316
      %v373 = vpop.f32.mrf.mxu0
      %v374 = vadd.f32 %v263, %v373
      %375 = vmatmul.f32.gmra.mxu0 %v319
      %v376 = vpop.f32.mrf.mxu0
      %v377 = vadd.f32 %v268, %v376
      %378 = vmatmul.f32.gmra.mxu0 %v322
      %v379 = vpop.f32.mrf.mxu0
      %v380 = vadd.f32 %v273, %v379
      %381 = vmatmul.f32.gmra.mxu0 %v325
      %v382 = vpop.f32.mrf.mxu0
      %v383 = vadd.f32 %v278, %v382
      %384 = vmatmul.f32.gmra.mxu0 %v328
      %v385 = vpop.f32.mrf.mxu0
      %v386 = vadd.f32 %v283, %v385
      %387 = vmatmul.f32.gmra.mxu0 %v331
      %v388 = vpop.f32.mrf.mxu0
      %v389 = vadd.f32 %v288, %v388
      %390 = vmatmul.f32.gmra.mxu0 %v334
      %v391 = vpop.f32.mrf.mxu0
      %v392 = vadd.f32 %v293, %v391
      %393 = vdwg.mxu0
      %394 = vmatpush.msra.mxu0 0.0
      %395 = vmatpush.msra.mxu0 0.0
      %396 = vmatpush.msra.mxu0 0.0
      %397 = vmatpush.msra.mxu0 0.0
      %398 = vmatpush.msra.mxu0 0.0
      %399 = vmatpush.msra.mxu0 0.0
      %400 = vmatpush.msra.mxu0 0.0
      %401 = vmatpush.msra.mxu0 0.0
      %402 = vmatpush.msra.mxu0 0.0
      %403 = vmatpush.msra.mxu0 0.0
      %404 = vmatpush.msra.mxu0 0.0
      %405 = vmatpush.msra.mxu0 0.0
      %406 = vmatpush.msra.mxu0 0.0
      %407 = vmatpush.msra.mxu0 0.0
      %408 = vmatpush.msra.mxu0 0.0
      %409 = vmatpush.msra.mxu0 %v339
      %410 = vmatmul.f32.gmra.mxu0 %v301
      %v411 = vpop.f32.mrf.mxu0
      %v412 = vadd.f32 %v238, %v411
      %413 = vmatmul.f32.gmra.mxu0 %v304
      %v414 = vpop.f32.mrf.mxu0
      %v415 = vadd.f32 %v243, %v414
      %416 = vmatmul.f32.gmra.mxu0 %v307
      %v417 = vpop.f32.mrf.mxu0
      %v418 = vadd.f32 %v248, %v417
      %419 = vmatmul.f32.gmra.mxu0 %v310
      %v420 = vpop.f32.mrf.mxu0
      %v421 = vadd.f32 %v253, %v420
      %422 = vmatmul.f32.gmra.mxu0 %v313
      %v423 = vpop.f32.mrf.mxu0
      %v424 = vadd.f32 %v258, %v423
      %425 = vmatmul.f32.gmra.mxu0 %v316
      %v426 = vpop.f32.mrf.mxu0
      %v427 = vadd.f32 %v263, %v426
      %428 = vmatmul.f32.gmra.mxu0 %v319
      %v429 = vpop.f32.mrf.mxu0
      %v430 = vadd.f32 %v268, %v429
      %431 = vmatmul.f32.gmra.mxu0 %v322
      %v432 = vpop.f32.mrf.mxu0
      %v433 = vadd.f32 %v273, %v432
      %434 = vmatmul.f32.gmra.mxu0 %v325
      %v435 = vpop.f32.mrf.mxu0
      %v436 = vadd.f32 %v278, %v435
      %437 = vmatmul.f32.gmra.mxu0 %v328
      %v438 = vpop.f32.mrf.mxu0
      %v439 = vadd.f32 %v283, %v438
      %440 = vmatmul.f32.gmra.mxu0 %v331
      %v441 = vpop.f32.mrf.mxu0
      %v442 = vadd.f32 %v288, %v441
      %443 = vmatmul.f32.gmra.mxu0 %v334
      %v444 = vpop.f32.mrf.mxu0
      %v445 = vadd.f32 %v293, %v444
      %446 = vdwg.mxu0
      %447 = vst [vmem:[%s208] sm:$0xff] %v359
      %448 = vst [vmem:[%s208 + $0x8] sm:$0xff] %v412
      %449 = vst [vmem:[%s208 + $0x10] sm:$0xff] %v362
      %450 = vst [vmem:[%s208 + $0x18] sm:$0xff] %v415
      %451 = vst [vmem:[%s208 + $0x20] sm:$0xff] %v365
      %452 = vst [vmem:[%s208 + $0x28] sm:$0xff] %v418
      %453 = vst [vmem:[%s208 + $0x30] sm:$0xff] %v368
      %454 = vst [vmem:[%s208 + $0x38] sm:$0xff] %v421
      %455 = vst [vmem:[%s208 + $0x40] sm:$0xff] %v371
      %456 = vst [vmem:[%s208 + $0x48] sm:$0xff] %v424
      %457 = vst [vmem:[%s208 + $0x50] sm:$0xff] %v374
      %458 = vst [vmem:[%s208 + $0x58] sm:$0xff] %v427
      %459 = vst [vmem:[%s208 + $0x60] sm:$0xff] %v377
      %460 = vst [vmem:[%s208 + $0x68] sm:$0xff] %v430
      %461 = vst [vmem:[%s208 + $0x70] sm:$0xff] %v380
      %462 = vst [vmem:[%s208 + $0x78] sm:$0xff] %v433
      %463 = vst [vmem:[%s208 + $0x80] sm:$0xff] %v383
      %464 = vst [vmem:[%s208 + $0x88] sm:$0xff] %v436
      %465 = vst [vmem:[%s208 + $0x90] sm:$0xff] %v386
      %466 = vst [vmem:[%s208 + $0x98] sm:$0xff] %v439
      %467 = vst [vmem:[%s208 + $0xa0] sm:$0xff] %v389
      %468 = vst [vmem:[%s208 + $0xa8] sm:$0xff] %v442
      %469 = vst [vmem:[%s208 + $0xb0] sm:$0xff] %v392
      %470 = vst [vmem:[%s208 + $0xb8] sm:$0xff] %v445
      %s471 = smul.u32 2, %s19
      %p472 = scmp.lt.s32.totalorder %s18, 1
      %s473 = scalar_select %p472, %s18, 1
      %p474 = scmp.lt.s32.totalorder %s471, 1
      %s475 = scalar_select %p474, %s471, 1
      %s476 = smul.addr %s473, 24
      %s477 = sadd.s32 %s475, %s476
      %s478 = smul.addr %s477, 8
      %s479 = scalar_lea.vmem %s3, %s478
      // Predicated region
      $region33: #{polar_backbone_pre.1} parent=31 // pred_check
        %p480 = pneg %p116
      $region34: #{polar_backbone_pre.1} parent=31 // pred_check_branch
        %482 = sbr.rel (%p480) target = $region36
      $region35: #{polar_backbone_pre.1} parent=31 // pred_region
        %s483 = smul.u32 2, %s19
      $region36: #{polar_backbone_pre.1} parent=31 // pred_fallthru
        _
    $region32: #{polar_backbone_pre.1} parent=5 // pred_fallthru
      _
    %p484 = scmp.le.s32.totalorder 2, %s9
    // Predicated region
    $region37: #{polar_backbone_pre.1} parent=5 // pred_check
      %p485 = pneg %p484
    $region38: #{polar_backbone_pre.1} parent=5 // pred_check_branch
      %487 = sbr.rel (%p485) target = $region40
    $region39: #{polar_backbone_pre.1} parent=5 // pred_region
      %s488 = ssub.s32 %s9, 2
      // Predicated region
      $region41: #{polar_backbone_pre.1} parent=39 // pred_check
        %p489 = pneg %p122
      $region42: #{polar_backbone_pre.1} parent=39 // pred_check_branch
        %491 = sbr.rel (%p489) target = $region44
      $region43: #{polar_backbone_pre.1} parent=39 // pred_region
        %s492 = smul.u32 2, %s21
        %p493 = scmp.lt.s32.totalorder %s20, 1
        %s494 = scalar_select %p493, %s20, 1
        %p495 = scmp.lt.s32.totalorder %s492, 1
        %s496 = scalar_select %p495, %s492, 1
        %s497 = smul.addr %s494, 24
        %s498 = sadd.s32 %s496, %s497
        %s499 = smul.addr %s498, 8
        %s500 = scalar_lea.vmem %s3, %s499
      $region44: #{polar_backbone_pre.1} parent=39 // pred_fallthru
        _
    $region40: #{polar_backbone_pre.1} parent=5 // pred_fallthru
      _
  $region6: #{polar_backbone_pre.1} parent=0 // loop_footer
    %s13 = sadd.s32 1, %s9
  $region7: #{polar_backbone_pre.1} parent=0 // loop_footer_branch
    %8 = sbr.rel target = $region3
  $region8: #{polar_backbone_pre.1} parent=0 // loop_exit
    _

</llo_original>
